<compile_context>
chip_gen: v6e
topology: v6e:2x2x1
jax: 0.10.0
libtpu: 0.0.40
codegen_flags: <defaults>
</compile_context>

<pallas_src>
import jax
import jax.numpy as jnp
from jax.experimental import pallas as pl
from jax.experimental.pallas import tpu as pltpu


def _linear_relu_kernel(xt_ref, w_ref, b_ref, o_ref):
    """One lane-dense output block.

    xt_ref: (K, tn)   -- batch on the lane axis
    w_ref : (Nf, K)   -- tiny, resident
    b_ref : (Nf, 1)   -- bias with the +0.5 already folded in
    o_ref : (Nf, tn)
    """
    k_dim = xt_ref.shape[0]
    w = w_ref[...]
    # Accumulator starts from (bias + 0.5) broadcast across lanes.
    acc = jnp.broadcast_to(b_ref[...], o_ref.shape)
    # K is tiny (10): statically unrolled VPU multiply-adds, no MXU.
    for k in range(k_dim):
        acc = acc + w[:, k:k + 1] * xt_ref[k:k + 1, :]
    o_ref[...] = jnp.maximum(acc, jnp.float32(0.0)).astype(o_ref.dtype)


def linear_relu(x, weight, bias, *, block_cols=32768, min_pallas_batch=64,
                force_pallas=False):
    """relu(x @ weight.T + bias + 0.5) with the matmul done lane-dense on VPU.

    x: (N, K) f32, weight: (Nf, K) f32, bias: (Nf,) f32 -> (N, Nf) f32
    """
    n, k = x.shape
    nf = weight.shape[0]

    if n < min_pallas_batch and not force_pallas:
        # At tiny batch the custom-call launch latency dominates; let XLA fuse.
        return jnp.maximum(x @ weight.T + bias + jnp.float32(0.5), 0.0)

    # Wrapper-side layout plumbing: put the batch on the lane (last) axis.
    x_t = jnp.asarray(x, jnp.float32).T                       # (K, N)
    w = jnp.asarray(weight, jnp.float32)                      # (Nf, K)
    b_col = (jnp.asarray(bias, jnp.float32)
             + jnp.float32(0.5)).reshape(nf, 1)               # (Nf, 1)

    # Batch tile: whole array when it fits one fat block, else a multiple of
    # 128 lanes.  Per-block f32 footprint (x + out, double-buffered) at the
    # default 32768 is ~5.5 MB -> safe under v5e's 16 MiB scoped default and
    # v7x's 32 MiB scoped / 64 MiB physical VMEM.
    tn = n if n <= block_cols else block_cols
    grid_n = pl.cdiv(n, tn)

    vmem = pltpu.MemorySpace.VMEM
    out_t = pl.pallas_call(
        _linear_relu_kernel,
        out_shape=jax.ShapeDtypeStruct((nf, n), jnp.float32),
        grid=(grid_n,),
        in_specs=[
            pl.BlockSpec((k, tn), lambda i: (0, i), memory_space=vmem),
            pl.BlockSpec((nf, k), lambda i: (0, 0), memory_space=vmem),
            pl.BlockSpec((nf, 1), lambda i: (0, 0), memory_space=vmem),
        ],
        out_specs=pl.BlockSpec((nf, tn), lambda i: (0, i), memory_space=vmem),
        compiler_params=pltpu.CompilerParams(
            dimension_semantics=("parallel",)),
    )(x_t, w, b_col)

    return out_t.T                                            # (N, Nf)


if __name__ == "__main__":
    key = jax.random.PRNGKey(0)
    k_x, k_w, k_b, k_x2 = jax.random.split(key, 4)

    in_features, out_features = 10, 11
    batch = 2

    # Deterministic parameter init (matches nn.Linear's U(-1/sqrt(fan_in), .))
    bound = 1.0 / float(in_features) ** 0.5
    weight = jax.random.uniform(
        k_w, (out_features, in_features), jnp.float32, -bound, bound)
    bias = jax.random.uniform(
        k_b, (out_features,), jnp.float32, -bound, bound)

    def ref_fn(xx):
        return jnp.maximum(xx @ weight.T + bias + 0.5, 0.0)

    # Small shape consistent with the module (batch=2, features=10).
    x = jax.random.normal(k_x, (batch, in_features), jnp.float32)

    # Gated path: tiny batch goes through the XLA fallback.
    out_gated = jax.block_until_ready(linear_relu(x, weight, bias))
    assert out_gated.shape == (batch, out_features)
    assert jnp.allclose(out_gated, ref_fn(x), atol=1e-5, rtol=1e-5)

    # Forced Pallas path at the small shape (single whole-array block).
    out_small = jax.block_until_ready(
        linear_relu(x, weight, bias, force_pallas=True))
    assert out_small.shape == (batch, out_features)
    assert jnp.allclose(out_small, ref_fn(x), atol=1e-5, rtol=1e-5)

    # Exercise the lane-dense multi-block tiled path (grid_n = 4).
    x_big = jax.random.normal(k_x2, (1024, in_features), jnp.float32)
    out_big = jax.block_until_ready(
        linear_relu(x_big, weight, bias, block_cols=256))
    assert out_big.shape == (1024, out_features)
    assert jnp.allclose(out_big, ref_fn(x_big), atol=1e-5, rtol=1e-5)

    print("KERNEL_OK")
</pallas_src>

<mosaic_0001>
module attributes {stable_mosaic.version = 11 : i64} {
  func.func @_linear_relu_kernel(%arg0: i32, %arg1: memref<10x2xf32, #tpu.memory_space<vmem>>, %arg2: memref<11x10xf32, #tpu.memory_space<vmem>>, %arg3: memref<11x1xf32, #tpu.memory_space<vmem>>, %arg4: memref<11x2xf32, #tpu.memory_space<vmem>>) attributes {dimension_semantics = [#tpu.dimension_semantics<parallel>], iteration_bounds = array<i64: 1>, scalar_prefetch = 0 : i64, scratch_operands = 0 : i64, tpu.core_type = #tpu.core_type<tc>, window_params = [{transform_indices = @transform_0, window_bounds = array<i64: 10, 2>}, {pipeline_mode = #tpu.pipeline_mode<synchronous>, transform_indices = @transform_1, window_bounds = array<i64: 11, 10>}, {pipeline_mode = #tpu.pipeline_mode<synchronous>, transform_indices = @transform_2, window_bounds = array<i64: 11, 1>}, {transform_indices = @transform_3, window_bounds = array<i64: 11, 2>}]} {
    %c0 = arith.constant 0 : index
    %c0_0 = arith.constant 0 : index
    %0 = vector.load %arg2[%c0, %c0_0] : memref<11x10xf32, #tpu.memory_space<vmem>>, vector<11x10xf32>
    %c0_1 = arith.constant 0 : index
    %c0_2 = arith.constant 0 : index
    %1 = vector.load %arg3[%c0_1, %c0_2] : memref<11x1xf32, #tpu.memory_space<vmem>>, vector<11x1xf32>
    %2 = vector.shape_cast %1 : vector<11x1xf32> to vector<11x1xf32>
    %3 = vector.broadcast %2 : vector<11x1xf32> to vector<11x2xf32>
    %4 = vector.extract_strided_slice %0 {offsets = [0, 0], sizes = [11, 1], strides = [1, 1]} : vector<11x10xf32> to vector<11x1xf32>
    %c0_3 = arith.constant 0 : index
    %c0_4 = arith.constant 0 : index
    %5 = vector.load %arg1[%c0_3, %c0_4] : memref<10x2xf32, #tpu.memory_space<vmem>>, vector<1x2xf32>
    %6 = vector.broadcast %4 : vector<11x1xf32> to vector<11x2xf32>
    %7 = vector.broadcast %5 : vector<1x2xf32> to vector<11x2xf32>
    %8 = arith.mulf %6, %7 : vector<11x2xf32>
    %9 = arith.addf %3, %8 : vector<11x2xf32>
    %10 = vector.extract_strided_slice %0 {offsets = [0, 1], sizes = [11, 1], strides = [1, 1]} : vector<11x10xf32> to vector<11x1xf32>
    %c1 = arith.constant 1 : index
    %c0_5 = arith.constant 0 : index
    %11 = vector.load %arg1[%c1, %c0_5] : memref<10x2xf32, #tpu.memory_space<vmem>>, vector<1x2xf32>
    %12 = vector.broadcast %10 : vector<11x1xf32> to vector<11x2xf32>
    %13 = vector.broadcast %11 : vector<1x2xf32> to vector<11x2xf32>
    %14 = arith.mulf %12, %13 : vector<11x2xf32>
    %15 = arith.addf %9, %14 : vector<11x2xf32>
    %16 = vector.extract_strided_slice %0 {offsets = [0, 2], sizes = [11, 1], strides = [1, 1]} : vector<11x10xf32> to vector<11x1xf32>
    %c2 = arith.constant 2 : index
    %c0_6 = arith.constant 0 : index
    %17 = vector.load %arg1[%c2, %c0_6] : memref<10x2xf32, #tpu.memory_space<vmem>>, vector<1x2xf32>
    %18 = vector.broadcast %16 : vector<11x1xf32> to vector<11x2xf32>
    %19 = vector.broadcast %17 : vector<1x2xf32> to vector<11x2xf32>
    %20 = arith.mulf %18, %19 : vector<11x2xf32>
    %21 = arith.addf %15, %20 : vector<11x2xf32>
    %22 = vector.extract_strided_slice %0 {offsets = [0, 3], sizes = [11, 1], strides = [1, 1]} : vector<11x10xf32> to vector<11x1xf32>
    %c3 = arith.constant 3 : index
    %c0_7 = arith.constant 0 : index
    %23 = vector.load %arg1[%c3, %c0_7] : memref<10x2xf32, #tpu.memory_space<vmem>>, vector<1x2xf32>
    %24 = vector.broadcast %22 : vector<11x1xf32> to vector<11x2xf32>
    %25 = vector.broadcast %23 : vector<1x2xf32> to vector<11x2xf32>
    %26 = arith.mulf %24, %25 : vector<11x2xf32>
    %27 = arith.addf %21, %26 : vector<11x2xf32>
    %28 = vector.extract_strided_slice %0 {offsets = [0, 4], sizes = [11, 1], strides = [1, 1]} : vector<11x10xf32> to vector<11x1xf32>
    %c4 = arith.constant 4 : index
    %c0_8 = arith.constant 0 : index
    %29 = vector.load %arg1[%c4, %c0_8] : memref<10x2xf32, #tpu.memory_space<vmem>>, vector<1x2xf32>
    %30 = vector.broadcast %28 : vector<11x1xf32> to vector<11x2xf32>
    %31 = vector.broadcast %29 : vector<1x2xf32> to vector<11x2xf32>
    %32 = arith.mulf %30, %31 : vector<11x2xf32>
    %33 = arith.addf %27, %32 : vector<11x2xf32>
    %34 = vector.extract_strided_slice %0 {offsets = [0, 5], sizes = [11, 1], strides = [1, 1]} : vector<11x10xf32> to vector<11x1xf32>
    %c5 = arith.constant 5 : index
    %c0_9 = arith.constant 0 : index
    %35 = vector.load %arg1[%c5, %c0_9] : memref<10x2xf32, #tpu.memory_space<vmem>>, vector<1x2xf32>
    %36 = vector.broadcast %34 : vector<11x1xf32> to vector<11x2xf32>
    %37 = vector.broadcast %35 : vector<1x2xf32> to vector<11x2xf32>
    %38 = arith.mulf %36, %37 : vector<11x2xf32>
    %39 = arith.addf %33, %38 : vector<11x2xf32>
    %40 = vector.extract_strided_slice %0 {offsets = [0, 6], sizes = [11, 1], strides = [1, 1]} : vector<11x10xf32> to vector<11x1xf32>
    %c6 = arith.constant 6 : index
    %c0_10 = arith.constant 0 : index
    %41 = vector.load %arg1[%c6, %c0_10] : memref<10x2xf32, #tpu.memory_space<vmem>>, vector<1x2xf32>
    %42 = vector.broadcast %40 : vector<11x1xf32> to vector<11x2xf32>
    %43 = vector.broadcast %41 : vector<1x2xf32> to vector<11x2xf32>
    %44 = arith.mulf %42, %43 : vector<11x2xf32>
    %45 = arith.addf %39, %44 : vector<11x2xf32>
    %46 = vector.extract_strided_slice %0 {offsets = [0, 7], sizes = [11, 1], strides = [1, 1]} : vector<11x10xf32> to vector<11x1xf32>
    %c7 = arith.constant 7 : index
    %c0_11 = arith.constant 0 : index
    %47 = vector.load %arg1[%c7, %c0_11] : memref<10x2xf32, #tpu.memory_space<vmem>>, vector<1x2xf32>
    %48 = vector.broadcast %46 : vector<11x1xf32> to vector<11x2xf32>
    %49 = vector.broadcast %47 : vector<1x2xf32> to vector<11x2xf32>
    %50 = arith.mulf %48, %49 : vector<11x2xf32>
    %51 = arith.addf %45, %50 : vector<11x2xf32>
    %52 = vector.extract_strided_slice %0 {offsets = [0, 8], sizes = [11, 1], strides = [1, 1]} : vector<11x10xf32> to vector<11x1xf32>
    %c8 = arith.constant 8 : index
    %c0_12 = arith.constant 0 : index
    %53 = vector.load %arg1[%c8, %c0_12] : memref<10x2xf32, #tpu.memory_space<vmem>>, vector<1x2xf32>
    %54 = vector.broadcast %52 : vector<11x1xf32> to vector<11x2xf32>
    %55 = vector.broadcast %53 : vector<1x2xf32> to vector<11x2xf32>
    %56 = arith.mulf %54, %55 : vector<11x2xf32>
    %57 = arith.addf %51, %56 : vector<11x2xf32>
    %58 = vector.extract_strided_slice %0 {offsets = [0, 9], sizes = [11, 1], strides = [1, 1]} : vector<11x10xf32> to vector<11x1xf32>
    %c9 = arith.constant 9 : index
    %c0_13 = arith.constant 0 : index
    %59 = vector.load %arg1[%c9, %c0_13] : memref<10x2xf32, #tpu.memory_space<vmem>>, vector<1x2xf32>
    %60 = vector.broadcast %58 : vector<11x1xf32> to vector<11x2xf32>
    %61 = vector.broadcast %59 : vector<1x2xf32> to vector<11x2xf32>
    %62 = arith.mulf %60, %61 : vector<11x2xf32>
    %63 = arith.addf %57, %62 : vector<11x2xf32>
    %cst = arith.constant 0.000000e+00 : f32
    %64 = vector.broadcast %cst : f32 to vector<11x2xf32>
    %65 = arith.maximumf %63, %64 : vector<11x2xf32>
    %c0_14 = arith.constant 0 : index
    %c0_15 = arith.constant 0 : index
    %66 = vector.load %arg4[%c0_14, %c0_15] : memref<11x2xf32, #tpu.memory_space<vmem>>, vector<11x2xf32>
    tpu.vector_store %arg4[%c0_14, %c0_15], %65 {strides = array<i32>} : memref<11x2xf32, #tpu.memory_space<vmem>>, vector<11x2xf32>,
    return
  }
  func.func @transform_0(%arg0: i32) -> (i32, i32) {
    %c0_i32 = arith.constant 0 : i32
    %c0_i32_0 = arith.constant 0 : i32
    return %c0_i32, %arg0 : i32, i32
  }
  func.func @transform_1(%arg0: i32) -> (i32, i32) {
    %c0_i32 = arith.constant 0 : i32
    %c0_i32_0 = arith.constant 0 : i32
    %c0_i32_1 = arith.constant 0 : i32
    return %c0_i32, %c0_i32_0 : i32, i32
  }
  func.func @transform_2(%arg0: i32) -> (i32, i32) {
    %c0_i32 = arith.constant 0 : i32
    %c0_i32_0 = arith.constant 0 : i32
    %c0_i32_1 = arith.constant 0 : i32
    return %c0_i32, %c0_i32_0 : i32, i32
  }
  func.func @transform_3(%arg0: i32) -> (i32, i32) {
    %c0_i32 = arith.constant 0 : i32
    %c0_i32_0 = arith.constant 0 : i32
    return %c0_i32, %arg0 : i32, i32
  }
}

</mosaic_0001>

<llo_original>
// kernel: tpu_custom_call.1
$region0: #{tpu_custom_call.1}
  #allocation0 [shape = 'u32[]', space=smem, size = 0x4, offset = 0x4, fixed_abs, tag = 'smem constant byte address 0x4 - core index']
  #allocation1 [shape = 'u32[144,128]{1,0:T(1,128)}', space=vmem, size = 0x12000, scoped, tag = 'internal scratch']
  %s0 = inlined_call_operand.vmem [shape: f32[10,2], index: 0, kind: input, shape index: {}]
  %s1 = inlined_call_operand.vmem [shape: f32[11,10], index: 1, kind: input, shape index: {}]
  %s2 = inlined_call_operand.vmem [shape: f32[11,1], index: 2, kind: input, shape index: {}]
  %s3 = inlined_call_operand.vmem [shape: f32[11,2], index: 3, kind: output, shape index: {}]
  %s4 = sld [smem:[#allocation0]]
  $region22: #{tpu_custom_call.1} parent=0
    _
  %s6 = ssub.s32 1, %s4
  %s7 = scalar_select 0, %s6, %s4
  // Predicated region
  $region2: #{tpu_custom_call.1} parent=0 // pred_check
    _
  $region3: #{tpu_custom_call.1} parent=0 // pred_check_branch
    %9 = sbr.rel (0) target = $region5
  $region4: #{tpu_custom_call.1} parent=0 // pred_region
    _
  $region5: #{tpu_custom_call.1} parent=0 // pred_fallthru
    _
  // Predicated region
  $region6: #{tpu_custom_call.1} parent=0 // pred_check
    _
  $region7: #{tpu_custom_call.1} parent=0 // pred_check_branch
    %11 = sbr.rel (0) target = $region9
  $region8: #{tpu_custom_call.1} parent=0 // pred_region
    _
  $region9: #{tpu_custom_call.1} parent=0 // pred_fallthru
    _
  // Predicated region
  $region10: #{tpu_custom_call.1} parent=0 // pred_check
    _
  $region11: #{tpu_custom_call.1} parent=0 // pred_check_branch
    %13 = sbr.rel (0) target = $region13
  $region12: #{tpu_custom_call.1} parent=0 // pred_region
    _
  $region13: #{tpu_custom_call.1} parent=0 // pred_fallthru
    _
  %v14 = vld [vmem:[%s1] sm:$0xff]
  %v15 = vld [vmem:[%s1 + $0x8] sm:$0x7]
  %v16 = vld [vmem:[%s2] sm:$0xff]
  %v17 = vld [vmem:[%s2 + $0x8] sm:$0x7]
  %19 = vset.pattern.permute.xlu0 0
  %20 = vperm.xlu0 %19, %v16
  %v21 = vpop.permute.xlu0 %20
  %24 = vset.pattern.permute.xlu0 0
  %25 = vperm.xlu0 %24, %v17
  %v26 = vpop.permute.xlu0 %25
  %v28 = vld [vmem:[%s0] sm:$0x1]
  %30 = vset.pattern.permute.xlu0 0
  %31 = vperm.xlu0 %30, %v14
  %v32 = vpop.permute.xlu0 %31
  %35 = vset.pattern.permute.xlu0 0
  %36 = vperm.xlu0 %35, %v15
  %v37 = vpop.permute.xlu0 %36
  %v39 = vlaneseq
  %v40 = vshrl.u32 %v39, 7
  %v41 = vsub.s32 0, %v40
  %v42 = vrot.slane %v28, %v41
  %v43 = vmul.f32 %v32, %v42
  %v44 = vmul.f32 %v37, %v42
  %v45 = vadd.f32 %v21, %v43
  %v46 = vadd.f32 %v26, %v44
  %v47 = vld [vmem:[%s0 + $0x1] sm:$0x1]
  %48 = vset.pattern.permute.xlu0 1
  %49 = vperm.xlu0 %48, %v14
  %v50 = vpop.permute.xlu0 %49
  %52 = vset.pattern.permute.xlu0 1
  %53 = vperm.xlu0 %52, %v15
  %v54 = vpop.permute.xlu0 %53
  %v56 = vlaneseq
  %v57 = vshrl.u32 %v56, 7
  %v58 = vsub.s32 0, %v57
  %v59 = vrot.slane %v47, %v58
  %v60 = vmul.f32 %v50, %v59
  %v61 = vmul.f32 %v54, %v59
  %v62 = vadd.f32 %v45, %v60
  %v63 = vadd.f32 %v46, %v61
  %v64 = vld [vmem:[%s0 + $0x2] sm:$0x1]
  %65 = vset.pattern.permute.xlu0 2
  %66 = vperm.xlu0 %65, %v14
  %v67 = vpop.permute.xlu0 %66
  %69 = vset.pattern.permute.xlu0 2
  %70 = vperm.xlu0 %69, %v15
  %v71 = vpop.permute.xlu0 %70
  %v73 = vlaneseq
  %v74 = vshrl.u32 %v73, 7
  %v75 = vsub.s32 0, %v74
  %v76 = vrot.slane %v64, %v75
  %v77 = vmul.f32 %v67, %v76
  %v78 = vmul.f32 %v71, %v76
  %v79 = vadd.f32 %v62, %v77
  %v80 = vadd.f32 %v63, %v78
  %v81 = vld [vmem:[%s0 + $0x3] sm:$0x1]
  %82 = vset.pattern.permute.xlu0 3
  %83 = vperm.xlu0 %82, %v14
  %v84 = vpop.permute.xlu0 %83
  %86 = vset.pattern.permute.xlu0 3
  %87 = vperm.xlu0 %86, %v15
  %v88 = vpop.permute.xlu0 %87
  %v90 = vlaneseq
  %v91 = vshrl.u32 %v90, 7
  %v92 = vsub.s32 0, %v91
  %v93 = vrot.slane %v81, %v92
  %v94 = vmul.f32 %v84, %v93
  %v95 = vmul.f32 %v88, %v93
  %v96 = vadd.f32 %v79, %v94
  %v97 = vadd.f32 %v80, %v95
  %v98 = vld [vmem:[%s0 + $0x4] sm:$0x1]
  %99 = vset.pattern.permute.xlu0 4
  %100 = vperm.xlu0 %99, %v14
  %v101 = vpop.permute.xlu0 %100
  %103 = vset.pattern.permute.xlu0 4
  %104 = vperm.xlu0 %103, %v15
  %v105 = vpop.permute.xlu0 %104
  %v107 = vlaneseq
  %v108 = vshrl.u32 %v107, 7
  %v109 = vsub.s32 0, %v108
  %v110 = vrot.slane %v98, %v109
  %v111 = vmul.f32 %v101, %v110
  %v112 = vmul.f32 %v105, %v110
  %v113 = vadd.f32 %v96, %v111
  %v114 = vadd.f32 %v97, %v112
  %v115 = vld [vmem:[%s0 + $0x5] sm:$0x1]
  %116 = vset.pattern.permute.xlu0 5
  %117 = vperm.xlu0 %116, %v14
  %v118 = vpop.permute.xlu0 %117
  %120 = vset.pattern.permute.xlu0 5
  %121 = vperm.xlu0 %120, %v15
  %v122 = vpop.permute.xlu0 %121
  %v124 = vlaneseq
  %v125 = vshrl.u32 %v124, 7
  %v126 = vsub.s32 0, %v125
  %v127 = vrot.slane %v115, %v126
  %v128 = vmul.f32 %v118, %v127
  %v129 = vmul.f32 %v122, %v127
  %v130 = vadd.f32 %v113, %v128
  %v131 = vadd.f32 %v114, %v129
  %v132 = vld [vmem:[%s0 + $0x6] sm:$0x1]
  %133 = vset.pattern.permute.xlu0 6
  %134 = vperm.xlu0 %133, %v14
  %v135 = vpop.permute.xlu0 %134
  %137 = vset.pattern.permute.xlu0 6
  %138 = vperm.xlu0 %137, %v15
  %v139 = vpop.permute.xlu0 %138
  %v141 = vlaneseq
  %v142 = vshrl.u32 %v141, 7
  %v143 = vsub.s32 0, %v142
  %v144 = vrot.slane %v132, %v143
  %v145 = vmul.f32 %v135, %v144
  %v146 = vmul.f32 %v139, %v144
  %v147 = vadd.f32 %v130, %v145
  %v148 = vadd.f32 %v131, %v146
  %v149 = vld [vmem:[%s0 + $0x7] sm:$0x1]
  %150 = vset.pattern.permute.xlu0 7
  %151 = vperm.xlu0 %150, %v14
  %v152 = vpop.permute.xlu0 %151
  %154 = vset.pattern.permute.xlu0 7
  %155 = vperm.xlu0 %154, %v15
  %v156 = vpop.permute.xlu0 %155
  %v158 = vlaneseq
  %v159 = vshrl.u32 %v158, 7
  %v160 = vsub.s32 0, %v159
  %v161 = vrot.slane %v149, %v160
  %v162 = vmul.f32 %v152, %v161
  %v163 = vmul.f32 %v156, %v161
  %v164 = vadd.f32 %v147, %v162
  %v165 = vadd.f32 %v148, %v163
  %v166 = vld [vmem:[%s0 + $0x8] sm:$0x1]
  %167 = vset.pattern.permute.xlu0 8
  %168 = vperm.xlu0 %167, %v14
  %v169 = vpop.permute.xlu0 %168
  %171 = vset.pattern.permute.xlu0 8
  %172 = vperm.xlu0 %171, %v15
  %v173 = vpop.permute.xlu0 %172
  %v175 = vlaneseq
  %v176 = vshrl.u32 %v175, 7
  %v177 = vsub.s32 0, %v176
  %v178 = vrot.slane %v166, %v177
  %v179 = vmul.f32 %v169, %v178
  %v180 = vmul.f32 %v173, %v178
  %v181 = vadd.f32 %v164, %v179
  %v182 = vadd.f32 %v165, %v180
  %v183 = vld [vmem:[%s0 + $0x9] sm:$0x1]
  %184 = vset.pattern.permute.xlu0 9
  %185 = vperm.xlu0 %184, %v14
  %v186 = vpop.permute.xlu0 %185
  %188 = vset.pattern.permute.xlu0 9
  %189 = vperm.xlu0 %188, %v15
  %v190 = vpop.permute.xlu0 %189
  %v192 = vlaneseq
  %v193 = vshrl.u32 %v192, 7
  %v194 = vsub.s32 0, %v193
  %v195 = vrot.slane %v183, %v194
  %v196 = vmul.f32 %v186, %v195
  %v197 = vmul.f32 %v190, %v195
  %v198 = vadd.f32 %v181, %v196
  %v199 = vadd.f32 %v182, %v197
  %v200 = vmax.f32 %v198, 0.0
  %v201 = vmax.f32 %v199, 0.0
  %vm202 = vcmask 15360
  %203 = vst.msk [vmem:[%s3] sm:$0xff] %vm202, %v200
  %vm204 = vcmask 10240
  %205 = vst.msk [vmem:[%s3 + $0x8] sm:$0x7] %vm204, %v201
  // Predicated region
  $region14: #{tpu_custom_call.1} parent=0 // pred_check
    _
  $region15: #{tpu_custom_call.1} parent=0 // pred_check_branch
    %207 = sbr.rel (0) target = $region17
  $region16: #{tpu_custom_call.1} parent=0 // pred_region
    _
  $region17: #{tpu_custom_call.1} parent=0 // pred_fallthru
    _
  // Predicated region
  $region18: #{tpu_custom_call.1} parent=0 // pred_check
    _
  $region19: #{tpu_custom_call.1} parent=0 // pred_check_branch
    %209 = sbr.rel (0) target = $region21
  $region20: #{tpu_custom_call.1} parent=0 // pred_region
    _
  $region21: #{tpu_custom_call.1} parent=0 // pred_fallthru
    _

</llo_original>
